<compile_context>
chip_gen: v7x
topology: tpu7x:2x2x1
jax: 0.10.0
libtpu: 0.0.40
codegen_flags: <defaults>
</compile_context>

<pallas_src>
import math

import jax
import jax.numpy as jnp
from jax import lax
from jax.experimental import pallas as pl
from jax.experimental.pallas import tpu as pltpu


_LANE = 128  # slab width; any total divisible by 128 needs no padding at all


def _target_tile_bytes():
    """Per-input tile size (in input-dtype bytes), sized off physical VMEM."""
    vmem_cap = 64 << 20  # conservative default (v7x per-TC VMEM)
    try:
        info = pltpu.get_tpu_info()
        cap = getattr(info, "vmem_capacity_bytes", None)
        if cap:
            vmem_cap = int(cap)
    except Exception:
        pass
    # 2 inputs x 2 pipeline buffers must stay well inside physical VMEM.
    return int(max(2 << 20, min(8 << 20, vmem_cap // 8)))


def _make_kernel(total, block_rows, lane):
    full_rows = total // lane          # rows that are entirely valid
    rem = total % lane                 # valid lanes in row `full_rows` (0 if none)
    use_8row_acc = (block_rows % 8 == 0)

    def reduce_rows(v):
        # (block_rows, lane) -> accumulator shape, using only cross-vreg VPU adds
        # in the 8-row case (the reshape is the canonical no-op relayout).
        if use_8row_acc:
            return jnp.sum(v.reshape(block_rows // 8, 8, lane), axis=0)
        return jnp.sum(v, axis=0, keepdims=True)

    def kernel(x_ref, t_ref, o_ref, acc_ref):
        i = pl.program_id(0)
        n = pl.num_programs(0)

        @pl.when(i == 0)
        def _init():
            acc_ref[...] = jnp.zeros_like(acc_ref)

        # Remap [-1, 1] -> [0, 1] for both logits and targets (module semantics).
        x = (x_ref[...].astype(jnp.float32) + 1.0) * 0.5
        t = (t_ref[...].astype(jnp.float32) + 1.0) * 0.5

        # Numerically stable BCE-with-logits per element.
        per = jnp.maximum(x, 0.0) - x * t + jnp.log1p(jnp.exp(-jnp.abs(x)))

        # A block is fully valid iff every row it covers is a fully-valid row.
        fully_valid = (i + 1) * block_rows <= full_rows

        @pl.when(fully_valid)
        def _fast():
            # Hot path: no masking work at all.
            acc_ref[...] += reduce_rows(per)

        @pl.when(jnp.logical_not(fully_valid))
        def _ragged():
            # Boundary block only: mask out-of-range rows (Pallas partial-block
            # garbage) and any lane-tail padding in the last valid row.
            row = lax.broadcasted_iota(jnp.int32, per.shape, 0)
            col = lax.broadcasted_iota(jnp.int32, per.shape, 1)
            grow = i * block_rows + row
            valid = (grow < full_rows) | ((grow == full_rows) & (col < rem))
            acc_ref[...] += reduce_rows(jnp.where(valid, per, 0.0))

        @pl.when(i == n - 1)
        def _finalize():
            # Single cross-sublane/lane reduce at the very end.
            o_ref[...] = jnp.zeros_like(o_ref) + jnp.sum(acc_ref[...])

    return kernel


def bce_with_logits_loss_pn_one(inputs, targets):
    """Pallas implementation of BCEWithLogitsLossPNOne.forward.

    Accepts float arrays (f32 or bf16) of any matching shape; returns scalar f32.
    """
    assert inputs.shape == targets.shape, (inputs.shape, targets.shape)

    total = math.prod(inputs.shape)
    lane = _LANE
    itemsize = int(jnp.dtype(inputs.dtype).itemsize)

    rem = total % lane
    rows = total // lane + (1 if rem else 0)
    pad = rows * lane - total

    def to_slab(a):
        flat = jnp.ravel(a)
        if pad:
            # TODO(synk): only element counts not divisible by 128 pay this copy;
            # removing it entirely needs a manual-DMA ragged tail.
            flat = jnp.pad(flat, (0, pad))
        return flat.reshape(rows, lane)

    x_slab = to_slab(inputs)
    t_slab = to_slab(targets)

    # Tile sizing: dtype-aware, as large as safely fits double-buffered VMEM.
    tile_bytes = _target_tile_bytes()
    cap_rows = max(8, (tile_bytes // (lane * itemsize)) // 8 * 8)
    if rows >= 8:
        block_rows = int(max(8, min(cap_rows, (rows // 8) * 8)))
    else:
        block_rows = rows  # equals the full dim -> allowed by the (8,128) rule

    num_blocks = -(-rows // block_rows)
    block_bytes = block_rows * lane * itemsize
    # 2 inputs x 2 buffers + headroom; explicit so the v5e 16 MiB scoped default
    # never bites, and capped well under v7x's 64 MiB physical VMEM.
    vmem_limit = int(min(48 << 20, max(32 << 20, 4 * block_bytes + (8 << 20))))

    acc_rows = 8 if block_rows % 8 == 0 else 1
    kernel = _make_kernel(total, block_rows, lane)

    out = pl.pallas_call(
        kernel,
        out_shape=jax.ShapeDtypeStruct((8, 128), jnp.float32),
        grid_spec=pltpu.PrefetchScalarGridSpec(
            num_scalar_prefetch=0,
            grid=(num_blocks,),
            in_specs=[
                pl.BlockSpec((block_rows, lane), lambda i: (i, 0)),
                pl.BlockSpec((block_rows, lane), lambda i: (i, 0)),
            ],
            out_specs=pl.BlockSpec((8, 128), lambda i: (0, 0)),
            scratch_shapes=[pltpu.VMEM((acc_rows, lane), jnp.float32)],
        ),
        compiler_params=pltpu.CompilerParams(
            dimension_semantics=("arbitrary",),
            vmem_limit_bytes=vmem_limit,
        ),
        cost_estimate=pl.CostEstimate(
            flops=7 * total,
            transcendentals=2 * total,
            bytes_accessed=2 * total * itemsize + 8 * 128 * 4,
        ),
    )(x_slab, t_slab)

    return out[0, 0] / jnp.float32(total)


def _reference(inputs, targets):
    """Pure-JAX reference matching torch.nn.BCEWithLogitsLoss semantics."""
    x = (inputs.astype(jnp.float32) + 1.0) / 2.0
    t = (targets.astype(jnp.float32) + 1.0) / 2.0
    per_elem = jnp.maximum(x, 0.0) - x * t + jnp.log1p(jnp.exp(-jnp.abs(x)))
    return jnp.mean(per_elem)


if __name__ == "__main__":
    key = jax.random.PRNGKey(0)
    k1, k2, k3, k4 = jax.random.split(key, 4)

    # Small tabular-style shape (batch, features), like the creditcard test.
    # total = 1920 -> zero-copy slab (divisible by 128), ragged last block.
    M, N = 64, 30
    inputs = jax.random.normal(k1, (M, N), dtype=jnp.float32)
    targets = jnp.where(jax.random.uniform(k2, (M, N)) > 0.5, 1.0, -1.0).astype(
        jnp.float32
    )
    loss = jax.block_until_ready(bce_with_logits_loss_pn_one(inputs, targets))
    ref = _reference(inputs, targets)
    assert jnp.allclose(loss, ref, rtol=1e-5, atol=1e-6), (loss, ref)

    # bf16 inputs, fully-aligned path (no mask, no pad).
    inputs_b = jax.random.normal(k3, (4, 256), dtype=jnp.bfloat16)
    targets_b = jnp.where(jax.random.uniform(k4, (4, 256)) > 0.5, 1.0, -1.0).astype(
        jnp.bfloat16
    )
    loss_b = jax.block_until_ready(bce_with_logits_loss_pn_one(inputs_b, targets_b))
    ref_b = _reference(inputs_b, targets_b)
    assert jnp.allclose(loss_b, ref_b, rtol=1e-5, atol=1e-6), (loss_b, ref_b)

    print("KERNEL_OK")
</pallas_src>

<mosaic_0001>
module attributes {stable_mosaic.version = 11 : i64} {
  func.func @kernel(%arg0: i32, %arg1: memref<8x128xf32, #tpu.memory_space<vmem>>, %arg2: memref<8x128xf32, #tpu.memory_space<vmem>>, %arg3: memref<8x128xf32, #tpu.memory_space<vmem>>, %arg4: memref<8x128xf32, #tpu.memory_space<vmem>>) attributes {dimension_semantics = [#tpu.dimension_semantics<arbitrary>], iteration_bounds = array<i64: 2>, scalar_prefetch = 0 : i64, scratch_operands = 1 : i64, tpu.core_type = #tpu.core_type<tc>, window_params = [{transform_indices = @transform_0, window_bounds = array<i64: 8, 128>}, {transform_indices = @transform_1, window_bounds = array<i64: 8, 128>}, {pipeline_mode = #tpu.pipeline_mode<synchronous>, transform_indices = @transform_2, window_bounds = array<i64: 8, 128>}]} {
    %c0_i32 = arith.constant 0 : i32
    %0 = arith.cmpi eq, %arg0, %c0_i32 : i32
    %1 = arith.extui %0 : i1 to i32
    %c0_i32_0 = arith.constant 0 : i32
    %2 = arith.cmpi ne, %1, %c0_i32_0 : i32
    scf.if %2 {
      %cst_13 = arith.constant 0.000000e+00 : f32
      %34 = vector.broadcast %cst_13 : f32 to vector<8x128xf32>
      %c0_14 = arith.constant 0 : index
      %c0_15 = arith.constant 0 : index
      %35 = vector.load %arg4[%c0_14, %c0_15] : memref<8x128xf32, #tpu.memory_space<vmem>>, vector<8x128xf32>
      tpu.vector_store %arg4[%c0_14, %c0_15], %34 {strides = array<i32>} : memref<8x128xf32, #tpu.memory_space<vmem>>, vector<8x128xf32>,
    } else {
    }
    %c0 = arith.constant 0 : index
    %c0_1 = arith.constant 0 : index
    %3 = vector.load %arg1[%c0, %c0_1] : memref<8x128xf32, #tpu.memory_space<vmem>>, vector<8x128xf32>
    %cst = arith.constant 1.000000e+00 : f32
    %4 = vector.broadcast %cst : f32 to vector<8x128xf32>
    %5 = arith.addf %3, %4 : vector<8x128xf32>
    %cst_2 = arith.constant 5.000000e-01 : f32
    %6 = vector.broadcast %cst_2 : f32 to vector<8x128xf32>
    %7 = arith.mulf %5, %6 : vector<8x128xf32>
    %c0_3 = arith.constant 0 : index
    %c0_4 = arith.constant 0 : index
    %8 = vector.load %arg2[%c0_3, %c0_4] : memref<8x128xf32, #tpu.memory_space<vmem>>, vector<8x128xf32>
    %cst_5 = arith.constant 1.000000e+00 : f32
    %9 = vector.broadcast %cst_5 : f32 to vector<8x128xf32>
    %10 = arith.addf %8, %9 : vector<8x128xf32>
    %cst_6 = arith.constant 5.000000e-01 : f32
    %11 = vector.broadcast %cst_6 : f32 to vector<8x128xf32>
    %12 = arith.mulf %10, %11 : vector<8x128xf32>
    %cst_7 = arith.constant 0.000000e+00 : f32
    %13 = vector.broadcast %cst_7 : f32 to vector<8x128xf32>
    %14 = arith.maximumf %7, %13 : vector<8x128xf32>
    %15 = arith.mulf %7, %12 : vector<8x128xf32>
    %16 = arith.subf %14, %15 : vector<8x128xf32>
    %17 = math.absf %7 : vector<8x128xf32>
    %cst_8 = arith.constant 0.000000e+00 : f32
    %18 = vector.broadcast %cst_8 : f32 to vector<8x128xf32>
    %19 = arith.subf %18, %17 : vector<8x128xf32>
    %20 = math.exp %19 : vector<8x128xf32>
    %21 = math.log1p %20 : vector<8x128xf32>
    %22 = arith.addf %16, %21 : vector<8x128xf32>
    %c1_i32 = arith.constant 1 : i32
    %23 = arith.addi %arg0, %c1_i32 : i32
    %c8_i32 = arith.constant 8 : i32
    %24 = arith.muli %23, %c8_i32 : i32
    %c15_i32 = arith.constant 15 : i32
    %25 = arith.cmpi sle, %24, %c15_i32 : i32
    %26 = arith.extui %25 : i1 to i32
    %c0_i32_9 = arith.constant 0 : i32
    %27 = arith.cmpi ne, %26, %c0_i32_9 : i32
    scf.if %27 {
      %c0_13 = arith.constant 0 : index
      %c0_14 = arith.constant 0 : index
      %34 = vector.load %arg4[%c0_13, %c0_14] : memref<8x128xf32, #tpu.memory_space<vmem>>, vector<8x128xf32>
      %35 = vector.shape_cast %22 : vector<8x128xf32> to vector<1x8x128xf32>
      %cst_15 = arith.constant dense<0.000000e+00> : vector<8x128xf32>
      %36 = vector.multi_reduction <add>, %35, %cst_15 [0] : vector<1x8x128xf32> to vector<8x128xf32>
      %37 = arith.addf %34, %36 : vector<8x128xf32>
      %c0_16 = arith.constant 0 : index
      %c0_17 = arith.constant 0 : index
      %38 = vector.load %arg4[%c0_16, %c0_17] : memref<8x128xf32, #tpu.memory_space<vmem>>, vector<8x128xf32>
      tpu.vector_store %arg4[%c0_16, %c0_17], %37 {strides = array<i32>} : memref<8x128xf32, #tpu.memory_space<vmem>>, vector<8x128xf32>,
    } else {
    }
    %true = arith.constant true
    %28 = arith.xori %25, %true : i1
    %29 = arith.extui %28 : i1 to i32
    %c0_i32_10 = arith.constant 0 : i32
    %30 = arith.cmpi ne, %29, %c0_i32_10 : i32
    scf.if %30 {
      %34 = tpu.iota {dimensions = array<i32: 0>} : vector<8x128xi32>
      %35 = tpu.iota {dimensions = array<i32: 1>} : vector<8x128xi32>
      %c8_i32_13 = arith.constant 8 : i32
      %36 = arith.muli %arg0, %c8_i32_13 : i32
      %37 = vector.broadcast %36 : i32 to vector<8x128xi32>
      %38 = arith.addi %37, %34 : vector<8x128xi32>
      %c15_i32_14 = arith.constant 15 : i32
      %39 = vector.broadcast %c15_i32_14 : i32 to vector<8x128xi32>
      %40 = arith.cmpi slt, %38, %39 : vector<8x128xi32>
      %c15_i32_15 = arith.constant 15 : i32
      %41 = vector.broadcast %c15_i32_15 : i32 to vector<8x128xi32>
      %42 = arith.cmpi eq, %38, %41 : vector<8x128xi32>
      %c0_i32_16 = arith.constant 0 : i32
      %43 = vector.broadcast %c0_i32_16 : i32 to vector<8x128xi32>
      %44 = arith.cmpi slt, %35, %43 : vector<8x128xi32>
      %45 = arith.andi %42, %44 : vector<8x128xi1>
      %46 = arith.ori %40, %45 : vector<8x128xi1>
      %c0_17 = arith.constant 0 : index
      %c0_18 = arith.constant 0 : index
      %47 = vector.load %arg4[%c0_17, %c0_18] : memref<8x128xf32, #tpu.memory_space<vmem>>, vector<8x128xf32>
      %cst_19 = arith.constant 0.000000e+00 : f32
      %48 = vector.broadcast %cst_19 : f32 to vector<8x128xf32>
      %49 = arith.select %46, %22, %48 : vector<8x128xi1>, vector<8x128xf32>
      %50 = vector.shape_cast %49 : vector<8x128xf32> to vector<1x8x128xf32>
      %cst_20 = arith.constant dense<0.000000e+00> : vector<8x128xf32>
      %51 = vector.multi_reduction <add>, %50, %cst_20 [0] : vector<1x8x128xf32> to vector<8x128xf32>
      %52 = arith.addf %47, %51 : vector<8x128xf32>
      %c0_21 = arith.constant 0 : index
      %c0_22 = arith.constant 0 : index
      %53 = vector.load %arg4[%c0_21, %c0_22] : memref<8x128xf32, #tpu.memory_space<vmem>>, vector<8x128xf32>
      tpu.vector_store %arg4[%c0_21, %c0_22], %52 {strides = array<i32>} : memref<8x128xf32, #tpu.memory_space<vmem>>, vector<8x128xf32>,
    } else {
    }
    %c1_i32_11 = arith.constant 1 : i32
    %31 = arith.cmpi eq, %arg0, %c1_i32_11 : i32
    %32 = arith.extui %31 : i1 to i32
    %c0_i32_12 = arith.constant 0 : i32
    %33 = arith.cmpi ne, %32, %c0_i32_12 : i32
    scf.if %33 {
      %cst_13 = arith.constant 0.000000e+00 : f32
      %34 = vector.broadcast %cst_13 : f32 to vector<8x128xf32>
      %c0_14 = arith.constant 0 : index
      %c0_15 = arith.constant 0 : index
      %35 = vector.load %arg4[%c0_14, %c0_15] : memref<8x128xf32, #tpu.memory_space<vmem>>, vector<8x128xf32>
      %36 = vector.shape_cast %35 : vector<8x128xf32> to vector<1x8x128xf32>
      %cst_16 = arith.constant dense<0.000000e+00> : vector<1xf32>
      %37 = vector.multi_reduction <add>, %36, %cst_16 [1, 2] : vector<1x8x128xf32> to vector<1xf32>
      %38 = vector.shape_cast %37 : vector<1xf32> to vector<1x1x1xf32>
      %39 = vector.extract %38[0, 0, 0] : f32 from vector<1x1x1xf32>
      %40 = vector.broadcast %39 : f32 to vector<8x128xf32>
      %41 = arith.addf %34, %40 : vector<8x128xf32>
      %c0_17 = arith.constant 0 : index
      %c0_18 = arith.constant 0 : index
      %42 = vector.load %arg3[%c0_17, %c0_18] : memref<8x128xf32, #tpu.memory_space<vmem>>, vector<8x128xf32>
      tpu.vector_store %arg3[%c0_17, %c0_18], %41 {strides = array<i32>} : memref<8x128xf32, #tpu.memory_space<vmem>>, vector<8x128xf32>,
    } else {
    }
    return
  }
  func.func @transform_0(%arg0: i32) -> (i32, i32) {
    %c0_i32 = arith.constant 0 : i32
    %c0_i32_0 = arith.constant 0 : i32
    return %arg0, %c0_i32 : i32, i32
  }
  func.func @transform_1(%arg0: i32) -> (i32, i32) {
    %c0_i32 = arith.constant 0 : i32
    %c0_i32_0 = arith.constant 0 : i32
    return %arg0, %c0_i32 : i32, i32
  }
  func.func @transform_2(%arg0: i32) -> (i32, i32) {
    %c0_i32 = arith.constant 0 : i32
    %c0_i32_0 = arith.constant 0 : i32
    %c0_i32_1 = arith.constant 0 : i32
    return %c0_i32, %c0_i32_0 : i32, i32
  }
}

</mosaic_0001>

<llo_original>
// kernel: tpu_custom_call.1
$region0: #{tpu_custom_call.1}
  #allocation0 [shape = 'u32[]', space=smem, size = 0x4, offset = 0x4, fixed_abs, tag = 'smem constant byte address 0x4 - core index']
  #allocation1 [shape = 'u32[144,128]{1,0:T(1,128)}', space=vmem, size = 0x12000, scoped, tag = 'internal scratch']
  #allocation2 [shape = 'f32[8,128]{1,0:T(8,128)}', space=vmem, size = 0x1000, scoped, tag = 'scratch operand']
  %s0 = inlined_call_operand.hbm [shape: f32[15,128], index: 0, kind: input, shape index: {}]
  %s1 = inlined_call_operand.hbm [shape: f32[15,128], index: 1, kind: input, shape index: {}]
  %s2 = inlined_call_operand.hbm [shape: f32[8,128], index: 2, kind: output, shape index: {}]
  %s3 = sld [smem:[#allocation0]]
  $region65: #{tpu_custom_call.1} parent=0
    _
  %s5 = ssub.s32 1, %s3
  %s6 = scalar_select 0, %s5, %s3
  $region1: #{tpu_custom_call.1} parent=0
    #allocation3 [shape = 'u8[8192]{0}', space=vmem, size = 0x2000, scoped, tag = 'input window, operand 0']
    #allocation4 [shape = 's32[2]{0}', space=sflag, size = 0x8, scoped, tag = 'scoped memory for tpu_custom_call.1']
    #allocation5 [shape = 's32[2]{0}', space=sflag, size = 0x8, scoped, tag = 'scoped memory for tpu_custom_call.1']
    #allocation6 [shape = 'u8[8192]{0}', space=vmem, size = 0x2000, scoped, tag = 'input window, operand 1']
    #allocation7 [shape = 's32[2]{0}', space=sflag, size = 0x8, scoped, tag = 'scoped memory for tpu_custom_call.1']
    #allocation8 [shape = 'u8[4096]{0}', space=vmem, size = 0x1000, scoped, tag = 'output window, operand 0, single buffered']
    %7 = vsyncpa [#allocation4], 0
    %s8 = scalar_lea.sflag [#allocation4], 1
    %9 = vsyncpa %s8, 0
    %10 = vsyncpa [#allocation7], 0
    %s11 = scalar_lea.sflag [#allocation7], 1
    %12 = vsyncpa %s11, 0
    %13 = vsyncpa [#allocation5], 0
    loop: start=0, step=1, limit=4
    $region2: #{tpu_custom_call.1} parent=1 // loop_pre_header
      _
    $region3: #{tpu_custom_call.1} parent=1 // loop_header
      %s15 = sphi 0, %s19
      %p16 = scmp.ge.s32.totalorder %s15, 4
      %s25 = sphi 0, %s27
      %s28 = sphi 0, %s25
      %s29 = sphi 0, %s28
      %s45 = sphi 0, %s29
      %s51 = sphi 0, %s53
      %s54 = sphi 0, %s51
      %s55 = sphi 0, %s54
      %s71 = sphi 0, %s55
      %s75 = sphi 0, %s75
      %s77 = sphi 0, %s75
      %s78 = sphi 0, %s77
      %s92 = sphi 0, %s78
    $region4: #{tpu_custom_call.1} parent=1 // loop_header_branch
      %18 = sbr.rel (%p16) target = $region8
    $region5: #{tpu_custom_call.1} parent=1 // loop_body
      %s20 = ssub.s32 %s15, 1
      %s21 = ssub.s32 %s15, 2
      %s22 = sadd.s32 %s15, 1
      %s23 = ssub.s32 %s15, %s22
      %p24 = scmp.eq.s32.totalorder %s23, 0
      %s26 = sadd.s32 %s25, 1
      %s27 = scalar_select %p24, %s25, %s26
      %p30 = pneg %p24
      %p31 = scmp.eq.s32.totalorder %s15, 1
      %p32 = por %p30, %p31
      %p33 = scmp.ne.s32.totalorder %s25, %s28
      %p34 = scmp.eq.s32.totalorder %s15, 0
      %p35 = por %p33, %p34
      %p36 = scmp.ne.s32.totalorder %s25, %s28
      %p37 = scmp.eq.s32.totalorder %s20, 1
      %p38 = por %p36, %p37
      %p39 = scmp.ne.s32.totalorder %s28, %s29
      %p40 = scmp.eq.s32.totalorder %s20, 0
      %p41 = por %p39, %p40
      %p42 = scmp.ne.s32.totalorder %s28, %s29
      %p43 = scmp.eq.s32.totalorder %s21, 1
      %p44 = por %p42, %p43
      %p46 = scmp.ne.s32.totalorder %s29, %s45
      %p47 = scmp.eq.s32.totalorder %s21, 0
      %p48 = por %p46, %p47
      %s49 = ssub.s32 %s15, %s22
      %p50 = scmp.eq.s32.totalorder %s49, 0
      %s52 = sadd.s32 %s51, 1
      %s53 = scalar_select %p50, %s51, %s52
      %p56 = pneg %p50
      %p57 = scmp.eq.s32.totalorder %s15, 1
      %p58 = por %p56, %p57
      %p59 = scmp.ne.s32.totalorder %s51, %s54
      %p60 = scmp.eq.s32.totalorder %s15, 0
      %p61 = por %p59, %p60
      %p62 = scmp.ne.s32.totalorder %s51, %s54
      %p63 = scmp.eq.s32.totalorder %s20, 1
      %p64 = por %p62, %p63
      %p65 = scmp.ne.s32.totalorder %s54, %s55
      %p66 = scmp.eq.s32.totalorder %s20, 0
      %p67 = por %p65, %p66
      %p68 = scmp.ne.s32.totalorder %s54, %s55
      %p69 = scmp.eq.s32.totalorder %s21, 1
      %p70 = por %p68, %p69
      %p72 = scmp.ne.s32.totalorder %s55, %s71
      %p73 = scmp.eq.s32.totalorder %s21, 0
      %p74 = por %p72, %p73
      %s76 = sadd.s32 %s75, 1
      %p79 = scmp.eq.s32.totalorder %s15, 1
      %p80 = scmp.ne.s32.totalorder %s75, %s77
      %p81 = scmp.eq.s32.totalorder %s15, 0
      %p82 = por %p80, %p81
      %p83 = scmp.ne.s32.totalorder %s75, %s77
      %p84 = scmp.eq.s32.totalorder %s20, 1
      %p85 = por %p83, %p84
      %p86 = scmp.ne.s32.totalorder %s77, %s78
      %p87 = scmp.eq.s32.totalorder %s20, 0
      %p88 = por %p86, %p87
      %p89 = scmp.ne.s32.totalorder %s77, %s78
      %p90 = scmp.eq.s32.totalorder %s21, 1
      %p91 = por %p89, %p90
      %p93 = scmp.ne.s32.totalorder %s78, %s92
      %p94 = scmp.eq.s32.totalorder %s21, 0
      %p95 = por %p93, %p94
      %p96 = scmp.le.s32.totalorder 1, %s15
      %p97 = scmp.lt.s32.totalorder %s15, 3
      %p98 = pnand %p96, %p97
      %p99 = pneg %p98
      // Predicated region
      $region9: #{tpu_custom_call.1} parent=5 // pred_check
        _
      $region10: #{tpu_custom_call.1} parent=5 // pred_check_branch
        %101 = sbr.rel (%p98) target = $region12
      $region11: #{tpu_custom_call.1} parent=5 // pred_region
        %s102 = ssub.s32 %s15, 1
      $region12: #{tpu_custom_call.1} parent=5 // pred_fallthru
        _
      %p103 = scmp.lt.s32.totalorder %s15, 2
      // Predicated region
      $region13: #{tpu_custom_call.1} parent=5 // pred_check
        %p104 = pneg %p103
      $region14: #{tpu_custom_call.1} parent=5 // pred_check_branch
        %106 = sbr.rel (%p104) target = $region16
      $region15: #{tpu_custom_call.1} parent=5 // pred_region
        // Predicated region
        $region17: #{tpu_custom_call.1} parent=15 // pred_check
          %p107 = pneg %p35
        $region18: #{tpu_custom_call.1} parent=15 // pred_check_branch
          %109 = sbr.rel (%p107) target = $region20
        $region19: #{tpu_custom_call.1} parent=15 // pred_region
          %s110 = sand.u32 %s25, 1
          %s111 = scalar_lea.sflag [#allocation4], %s110
          %s112 = sand.u32 %s25, 1
          %s113 = smul.addr %s112, 8
          %s114 = scalar_lea.vmem [#allocation3], %s113
          %s116 = ssub.s32 128, 128
          %117 = vsyncadd %s111, %s116
          %s118 = smul.addr %s15, 128
          %s119 = scalar_lea.hbm %s0, %s118
          %s121 = sshll.u32 %s114, 4
          %s122 = int_to_ptr.vmem [resolvable:$true] %s121
          %124 = dma.hbm_to_vmem [thread:$0]  %s119, 128, %s122, %s111
        $region20: #{tpu_custom_call.1} parent=15 // pred_fallthru
          _
        // Predicated region
        $region21: #{tpu_custom_call.1} parent=15 // pred_check
          %p125 = pneg %p61
        $region22: #{tpu_custom_call.1} parent=15 // pred_check_branch
          %127 = sbr.rel (%p125) target = $region24
        $region23: #{tpu_custom_call.1} parent=15 // pred_region
          %s128 = sand.u32 %s51, 1
          %s129 = scalar_lea.sflag [#allocation7], %s128
          %s130 = sand.u32 %s51, 1
          %s131 = smul.addr %s130, 8
          %s132 = scalar_lea.vmem [#allocation6], %s131
          %s134 = ssub.s32 128, 128
          %135 = vsyncadd %s129, %s134
          %s136 = smul.addr %s15, 128
          %s137 = scalar_lea.hbm %s1, %s136
          %s139 = sshll.u32 %s132, 4
          %s140 = int_to_ptr.vmem [resolvable:$true] %s139
          %142 = dma.hbm_to_vmem [thread:$0]  %s137, 128, %s140, %s129
        $region24: #{tpu_custom_call.1} parent=15 // pred_fallthru
          _
      $region16: #{tpu_custom_call.1} parent=5 // pred_fallthru
        _
      %p143 = scmp.le.s32.totalorder 1, %s15
      %p144 = scmp.lt.s32.totalorder %s15, 3
      %p145 = pnand %p143, %p144
      %p146 = pneg %p145
      // Predicated region
      $region25: #{tpu_custom_call.1} parent=5 // pred_check
        _
      $region26: #{tpu_custom_call.1} parent=5 // pred_check_branch
        %148 = sbr.rel (%p145) target = $region28
      $region27: #{tpu_custom_call.1} parent=5 // pred_region
        %s149 = ssub.s32 %s15, 1
        %s150 = sand.u32 %s28, 1
        %s151 = scalar_lea.sflag [#allocation4], %s150
        %s152 = sand.u32 %s28, 1
        %s153 = smul.addr %s152, 8
        %s154 = scalar_lea.vmem [#allocation3], %s153
        // Predicated region
        $region29: #{tpu_custom_call.1} parent=27 // pred_check
          %p155 = pneg %p41
        $region30: #{tpu_custom_call.1} parent=27 // pred_check_branch
          %157 = sbr.rel (%p155) target = $region32
        $region31: #{tpu_custom_call.1} parent=27 // pred_region
          %158 = dma.done %s151, 128
        $region32: #{tpu_custom_call.1} parent=27 // pred_fallthru
          _
        %s159 = sand.u32 %s54, 1
        %s160 = scalar_lea.sflag [#allocation7], %s159
        %s161 = sand.u32 %s54, 1
        %s162 = smul.addr %s161, 8
        %s163 = scalar_lea.vmem [#allocation6], %s162
        // Predicated region
        $region33: #{tpu_custom_call.1} parent=27 // pred_check
          %p164 = pneg %p67
        $region34: #{tpu_custom_call.1} parent=27 // pred_check_branch
          %166 = sbr.rel (%p164) target = $region36
        $region35: #{tpu_custom_call.1} parent=27 // pred_region
          %167 = dma.done %s160, 128
        $region36: #{tpu_custom_call.1} parent=27 // pred_fallthru
          _
        %s168 = sand.u32 %s28, 1
        %s169 = scalar_lea.sflag [#allocation4], %s168
        %s170 = sand.u32 %s28, 1
        %s171 = smul.addr %s170, 8
        %s172 = scalar_lea.vmem [#allocation3], %s171
        %p173 = pneg %p41
        %p174 = pneg %p38
        %s175 = sand.u32 %s54, 1
        %s176 = scalar_lea.sflag [#allocation7], %s175
        %s177 = sand.u32 %s54, 1
        %s178 = smul.addr %s177, 8
        %s179 = scalar_lea.vmem [#allocation6], %s178
        %p180 = pneg %p67
        %p181 = pneg %p64
        %p182 = pneg %p88
        %p183 = pneg %p85
        %p184 = scmp.eq.s32.totalorder %s20, 0
        // Predicated region
        $region37: #{tpu_custom_call.1} parent=27 // pred_check
          %p185 = pneg %p184
        $region38: #{tpu_custom_call.1} parent=27 // pred_check_branch
          %187 = sbr.rel (%p185) target = $region40
        $region39: #{tpu_custom_call.1} parent=27 // pred_region
          %188 = vst [vmem:[#allocation2] sm:$0xff] 0.0
        $region40: #{tpu_custom_call.1} parent=27 // pred_fallthru
          _
        %v189 = vld [vmem:[%s154] sm:$0xff]
        %v190 = vadd.f32 %v189, 1.0
        %v191 = vmul.f32 %v190, 0.5
        %v192 = vld [vmem:[%s163] sm:$0xff]
        %v193 = vadd.f32 %v192, 1.0
        %v194 = vmul.f32 %v193, 0.5
        %v195 = vmax.f32 %v191, 0.0
        %v196 = vmul.f32 %v191, %v194
        %v197 = vsub.f32 %v195, %v196
        %v198 = vand.u32 2147483647, %v191
        %v199 = vsub.f32 0.0, %v198
        %v200 = vmul.f32 %v199, 1.442695
        %v201 = vpow.pop %v200
        %v202 = vadd.f32 %v201, 1.0
        %v203 = vlog2.pop %v202
        %v204 = vmul.f32 %v203, 0.6931472
        %v205 = vmul.f32 -0.5, %v201
        %v206 = vadd.f32 %v205, 1.0
        %v207 = vmul.f32 %v206, %v201
        %v208 = vand.u32 2147483647, %v201
        %vm209 = vcmp.lt.f32.partialorder %v208, 0.0004427343
        %v210 = vsel %vm209, %v207, %v204
        %v211 = vadd.f32 %v197, %v210
        %s212 = sadd.s32 %s20, 1
        %s213 = smul.u32 %s212, 8
        %p214 = scmp.le.s32.totalorder %s213, 15
        // Predicated region
        $region41: #{tpu_custom_call.1} parent=27 // pred_check
          %p215 = pneg %p214
        $region42: #{tpu_custom_call.1} parent=27 // pred_check_branch
          %217 = sbr.rel (%p215) target = $region44
        $region43: #{tpu_custom_call.1} parent=27 // pred_region
          %v218 = vld [vmem:[#allocation2] sm:$0xff]
          %v219 = vadd.f32 %v211, 0.0
          %v220 = vadd.f32 %v218, %v219
          %221 = vst [vmem:[#allocation2] sm:$0xff] %v220
        $region44: #{tpu_custom_call.1} parent=27 // pred_fallthru
          _
        %p222 = scmp.gt.s32.totalorder %s213, 15
        // Predicated region
        $region45: #{tpu_custom_call.1} parent=27 // pred_check
          %p223 = pneg %p222
        $region46: #{tpu_custom_call.1} parent=27 // pred_check_branch
          %225 = sbr.rel (%p223) target = $region48
        $region47: #{tpu_custom_call.1} parent=27 // pred_region
          %v226 = vlaneseq
          %v227 = vshrl.u32 %v226, 7
          %v228 = vlaneseq
          %v229 = vand.u32 %v228, 127
          %s230 = smul.u32 %s20, 8
          %v231 = vstv %s230
          %v232 = vadd.s32 %v231, %v227
          %vm233 = vcmp.lt.s32.totalorder %v232, 15
          %vm234 = vcmp.eq.s32.totalorder %v232, 15
          %vm235 = vcmp.lt.s32.totalorder %v229, 0
          %vm236 = vmand %vm234, %vm235
          %vm237 = vmor %vm233, %vm236
          %v238 = vld [vmem:[#allocation2] sm:$0xff]
          %v239 = vsel %vm237, %v211, 0.0
          %v240 = vadd.f32 %v239, 0.0
          %v241 = vadd.f32 %v238, %v240
          %242 = vst [vmem:[#allocation2] sm:$0xff] %v241
        $region48: #{tpu_custom_call.1} parent=27 // pred_fallthru
          _
        %p243 = scmp.eq.s32.totalorder %s20, 1
        // Predicated region
        $region49: #{tpu_custom_call.1} parent=27 // pred_check
          %p244 = pneg %p243
        $region50: #{tpu_custom_call.1} parent=27 // pred_check_branch
          %246 = sbr.rel (%p244) target = $region52
        $region51: #{tpu_custom_call.1} parent=27 // pred_region
          %v247 = vld [vmem:[#allocation2] sm:$0xff]
          %248 = vadd.xlane.f32.xlu0 %v247
          %v249 = vpop.xlane.xlu0 %248
          %v250 = vrot.slane %v249, 4
          %v251 = vadd.f32 %v249, %v250
          %v252 = vrot.slane %v251, 2
          %v253 = vadd.f32 %v251, %v252
          %v254 = vrot.slane %v253, 1
          %v255 = vadd.f32 %v253, %v254
          %s256 = vtos %v255
          %v257 = vstv %s256
          %v258 = vadd.f32 %v257, 0.0
          %259 = vst [vmem:[#allocation8] sm:$0xff] %v258
        $region52: #{tpu_custom_call.1} parent=27 // pred_fallthru
          _
        // Predicated region
        $region53: #{tpu_custom_call.1} parent=27 // pred_check
          %p260 = pneg %p85
        $region54: #{tpu_custom_call.1} parent=27 // pred_check_branch
          %262 = sbr.rel (%p260) target = $region56
        $region55: #{tpu_custom_call.1} parent=27 // pred_region
          %s264 = ssub.s32 128, 128
          %265 = vsyncadd [#allocation5], %s264
          %s267 = sshll.u32 [#allocation8], 4
          %s268 = int_to_ptr.vmem [resolvable:$true] %s267
          %270 = dma.vmem_to_hbm [thread:$0]  %s268, 128, %s2, [#allocation5]
        $region56: #{tpu_custom_call.1} parent=27 // pred_fallthru
          _
        // Predicated region
        $region57: #{tpu_custom_call.1} parent=27 // pred_check
          %p271 = pneg %p85
        $region58: #{tpu_custom_call.1} parent=27 // pred_check_branch
          %273 = sbr.rel (%p271) target = $region60
        $region59: #{tpu_custom_call.1} parent=27 // pred_region
          %274 = dma.done [#allocation5], 128
        $region60: #{tpu_custom_call.1} parent=27 // pred_fallthru
          _
      $region28: #{tpu_custom_call.1} parent=5 // pred_fallthru
        _
      %p275 = scmp.le.s32.totalorder 2, %s15
      // Predicated region
      $region61: #{tpu_custom_call.1} parent=5 // pred_check
        %p276 = pneg %p275
      $region62: #{tpu_custom_call.1} parent=5 // pred_check_branch
        %278 = sbr.rel (%p276) target = $region64
      $region63: #{tpu_custom_call.1} parent=5 // pred_region
        %s279 = ssub.s32 %s15, 2
      $region64: #{tpu_custom_call.1} parent=5 // pred_fallthru
        _
    $region6: #{tpu_custom_call.1} parent=1 // loop_footer
      %s19 = sadd.s32 1, %s15
    $region7: #{tpu_custom_call.1} parent=1 // loop_footer_branch
      %14 = sbr.rel target = $region3
    $region8: #{tpu_custom_call.1} parent=1 // loop_exit
      _
    %280 = vsyncpa [#allocation4], 1
    %s281 = scalar_lea.sflag [#allocation4], 1
    %282 = vsyncpa %s281, 1
    %283 = vsyncpa [#allocation7], 1
    %s284 = scalar_lea.sflag [#allocation7], 1
    %285 = vsyncpa %s284, 1
    %286 = vsyncpa [#allocation5], 1
    %s287 = scalar_lea.sflag [#allocation5], 1
    %288 = vsyncpa %s287, 1

</llo_original>
